<compile_context>
chip_gen: v7x
topology: tpu7x:2x2x1
jax: 0.10.0
libtpu: 0.0.40
codegen_flags: <defaults>
</compile_context>

<pallas_src>
import functools
import math

import jax
import jax.numpy as jnp
from jax import lax
from jax.experimental import pallas as pl
from jax.experimental.pallas import tpu as pltpu

NEG_SLOPE = 0.01                   # F.leaky_relu default negative_slope
_ROW_TILE = 512                    # rows per grid step once rows > one tile
_VMEM_LIMIT = 32 * 1024 * 1024     # explicit scoped-VMEM budget (fits v7x too)


def _leaky_relu(x):
    # max(x, 0.01*x): 2 VALU ops in f32, exact leaky_relu for slope < 1.
    return jnp.maximum(x, NEG_SLOPE * x)


# -----------------------------------------------------------------------------
# Kernels.  Per grid step: one (tile_rows, feat) activation block, all weights
# VMEM-resident.  Matmul operands in `w1_ref.dtype` (bf16 by default), f32
# accumulation, f32 elementwise.  Output block is (8, tile_rows) lane-major
# (8 identical sublane rows; the wrapper keeps row 0).
# -----------------------------------------------------------------------------
def _entire_kernel(x_ref, w1_ref, b1_ref, wr_ref, br_ref, wo_ref, bo_ref,
                   out_ref):
    wdt = w1_ref.dtype
    # input2hid: one K=(attr+sptm) MXU matmul (inputs pre-concatenated).
    h = jnp.dot(x_ref[...].astype(wdt), w1_ref[...],
                preferred_element_type=jnp.float32)
    h = _leaky_relu(h + b1_ref[...])

    # residual stack: fori_loop(unroll=True) keeps scheduler visibility while
    # bounding live ranges at 512-row tiles.
    def _res_body(i, h):
        r = _leaky_relu(
            jnp.dot(h.astype(wdt), wr_ref[i],
                    preferred_element_type=jnp.float32)
            + br_ref[i])
        return h + r

    h = lax.fori_loop(0, wr_ref.shape[0], _res_body, h, unroll=True)

    # hid2out as an NT matmul (wo_rows . h^T): result is lane-major (8, rows),
    # avoiding both a 1-column MXU matmul and a sublane->lane transpose.
    out = lax.dot_general(wo_ref[...], h.astype(wdt),
                          dimension_numbers=(((1,), (1,)), ((), ())),
                          preferred_element_type=jnp.float32)
    out_ref[...] = out + bo_ref[...]


def _local_kernel(x_ref, w1_ref, b1_ref, w2_ref, b2_ref, wo_ref, bo_ref,
                  out_ref):
    wdt = w1_ref.dtype
    h = _leaky_relu(
        jnp.dot(x_ref[...].astype(wdt), w1_ref[...],
                preferred_element_type=jnp.float32) + b1_ref[...])
    h = _leaky_relu(
        jnp.dot(h.astype(wdt), w2_ref[...],
                preferred_element_type=jnp.float32) + b2_ref[...])
    out = lax.dot_general(wo_ref[...], h.astype(wdt),
                          dimension_numbers=(((1,), (1,)), ((), ())),
                          preferred_element_type=jnp.float32)
    out_ref[...] = out + bo_ref[...]


# -----------------------------------------------------------------------------
# Row-tiled launcher shared by both heads.
#   * rows <= _ROW_TILE : single full-array block (no padding needed at all).
#   * rows >  _ROW_TILE : grid = cdiv(rows, 512), weights stay VMEM-resident
#     (index_map -> zeros), row axis "parallel" for v7x megacore sharding.
# -----------------------------------------------------------------------------
def _row_tiled_head(kernel, x, weights, *, flops):
    rows, feat = x.shape
    if rows <= _ROW_TILE:
        tb, n_tiles = rows, 1
    else:
        tb, n_tiles = _ROW_TILE, pl.cdiv(rows, _ROW_TILE)
    out_cols = n_tiles * tb

    in_specs = [pl.BlockSpec((tb, feat), lambda i: (i, 0))]
    in_specs += [pl.BlockSpec(w.shape, (lambda i, nd=w.ndim: (0,) * nd))
                 for w in weights]

    bytes_accessed = int(x.size) * x.dtype.itemsize
    bytes_accessed += sum(int(w.size) * w.dtype.itemsize for w in weights)
    bytes_accessed += 8 * out_cols * 4

    slab = pl.pallas_call(
        kernel,
        out_shape=jax.ShapeDtypeStruct((8, out_cols), jnp.float32),
        grid=(n_tiles,),
        in_specs=in_specs,
        out_specs=pl.BlockSpec((8, tb), lambda i: (0, i)),
        compiler_params=pltpu.CompilerParams(
            dimension_semantics=("parallel",),
            vmem_limit_bytes=_VMEM_LIMIT),
        cost_estimate=pl.CostEstimate(flops=flops, transcendentals=0,
                                      bytes_accessed=bytes_accessed),
    )(x, *weights)
    # keep sublane row 0, trim the padded tail columns, back to (rows, 1).
    return slab[0, :rows][:, None]


# -----------------------------------------------------------------------------
# Wrapper-side parameter re-plumbing (tiny, static):
#   * weights cast once to the matmul compute dtype (bf16 by default)
#   * output weights transposed to rows and replicated across 8 sublanes so
#     the final projection is a standard M=8 NT matmul
#   * residual biases shaped (num_fcs, 1, H) for clean 2-D broadcasting
# -----------------------------------------------------------------------------
def _prepare_entire(e, cd):
    hidden = e["b1"].shape[-1]
    return (e["w1"].astype(cd),                                   # (C, H)
            e["b1"],                                              # (1, H) f32
            e["wr"].astype(cd),                                   # (F, H, H)
            e["br"][:, None, :],                                  # (F, 1, H)
            jnp.broadcast_to(e["wo"].T, (8, hidden)).astype(cd),  # (8, H)
            e["bo"])                                              # (1, 1)


def _prepare_local(l, cd):
    return (l["w1"].astype(cd),                                   # (S, 64)
            l["b1"],                                              # (1, 64)
            l["w2"].astype(cd),                                   # (64, 32)
            l["b2"],                                              # (1, 32)
            jnp.broadcast_to(l["w3"].T, (8, l["w3"].shape[0])).astype(cd),
            l["b3"])                                              # (1, 1)


def entire_estimate(attr_t, sptm_t, entire_params, compute_dtype=jnp.bfloat16):
    # lane-axis concat outside the kernel -> one K=(attr+sptm) matmul inside.
    x = jnp.concatenate([attr_t, sptm_t], axis=1)
    weights = _prepare_entire(entire_params, compute_dtype)
    rows, c = x.shape
    hidden = entire_params["b1"].shape[-1]
    num_fcs = entire_params["wr"].shape[0]
    flops = 2 * rows * (c * hidden + num_fcs * hidden * hidden + hidden)
    return _row_tiled_head(_entire_kernel, x, weights, flops=flops)


def local_estimate(sptm_s0, local_params, compute_dtype=jnp.bfloat16):
    weights = _prepare_local(local_params, compute_dtype)
    rows, s = sptm_s0.shape
    flops = 2 * rows * (s * 64 + 64 * 32 + 32)
    return _row_tiled_head(_local_kernel, sptm_s0, weights, flops=flops)


# -----------------------------------------------------------------------------
# Net.forward equivalent (estimator heads):
#   entire_out = entire_estimate(attr_t, sptm_t)
#   if training: local_out = local_estimate(sptm_s[0]); return (entire_out,
#                                                              (local_out, sptm_l))
#   else:        return entire_out
# -----------------------------------------------------------------------------
@functools.partial(jax.jit, static_argnames=("training", "compute_dtype"))
def net_forward(attr_t, sptm_s0, sptm_l, sptm_t, params, training=True,
                compute_dtype=jnp.bfloat16):
    entire_out = entire_estimate(attr_t, sptm_t, params["entire"], compute_dtype)
    if training:
        local_out = local_estimate(sptm_s0, params["local"], compute_dtype)
        return entire_out, (local_out, sptm_l)
    return entire_out


# -----------------------------------------------------------------------------
# Parameter init (mirrors Net.init_weight: xavier_uniform_ weights, zero bias)
# -----------------------------------------------------------------------------
def _xavier_uniform(key, fan_in, fan_out, shape):
    bound = math.sqrt(6.0 / (fan_in + fan_out))
    return jax.random.uniform(key, shape, jnp.float32, -bound, bound)


def init_params(key, attr_size, sptm_size, hidden_size, num_final_fcs):
    ks = jax.random.split(key, 8)
    in_size = attr_size + sptm_size
    entire = {
        "w1": _xavier_uniform(ks[0], in_size, hidden_size, (in_size, hidden_size)),
        "b1": jnp.zeros((1, hidden_size), jnp.float32),
        "wr": _xavier_uniform(ks[1], hidden_size, hidden_size,
                              (num_final_fcs, hidden_size, hidden_size)),
        "br": jnp.zeros((num_final_fcs, hidden_size), jnp.float32),
        "wo": _xavier_uniform(ks[2], hidden_size, 1, (hidden_size, 1)),
        "bo": jnp.zeros((1, 1), jnp.float32),
    }
    local = {
        "w1": _xavier_uniform(ks[3], sptm_size, 64, (sptm_size, 64)),
        "b1": jnp.zeros((1, 64), jnp.float32),
        "w2": _xavier_uniform(ks[4], 64, 32, (64, 32)),
        "b2": jnp.zeros((1, 32), jnp.float32),
        "w3": _xavier_uniform(ks[5], 32, 1, (32, 1)),
        "b3": jnp.zeros((1, 1), jnp.float32),
    }
    return {"entire": entire, "local": local}


# pure-JAX references (same operand-dtype casting so bf16 check is tight)
def _ref_entire(attr_t, sptm_t, p, cd=jnp.float32):
    x = jnp.concatenate([attr_t, sptm_t], axis=1)
    h = jax.nn.leaky_relu(
        jnp.dot(x.astype(cd), p["w1"].astype(cd),
                preferred_element_type=jnp.float32) + p["b1"], NEG_SLOPE)
    for i in range(p["wr"].shape[0]):
        r = jax.nn.leaky_relu(
            jnp.dot(h.astype(cd), p["wr"][i].astype(cd),
                    preferred_element_type=jnp.float32) + p["br"][i], NEG_SLOPE)
        h = h + r
    return jnp.dot(h.astype(cd), p["wo"].astype(cd),
                   preferred_element_type=jnp.float32) + p["bo"]


def _ref_local(x, p, cd=jnp.float32):
    h = jax.nn.leaky_relu(
        jnp.dot(x.astype(cd), p["w1"].astype(cd),
                preferred_element_type=jnp.float32) + p["b1"], NEG_SLOPE)
    h = jax.nn.leaky_relu(
        jnp.dot(h.astype(cd), p["w2"].astype(cd),
                preferred_element_type=jnp.float32) + p["b2"], NEG_SLOPE)
    return jnp.dot(h.astype(cd), p["w3"].astype(cd),
                   preferred_element_type=jnp.float32) + p["b3"]


if __name__ == "__main__":
    B = 8            # batch
    ATTR = 16        # attr_net.out_size()   (synthetic)
    SPTM = 32        # spatio_temporal.out_size() (synthetic)
    HID = 128        # final_fc_size
    NUM_FCS = 3      # num_final_fcs
    L = 16           # total packed local-sequence length

    key = jax.random.PRNGKey(0)
    k_attr, k_sptm_t, k_sptm_s, k_params, k_big = jax.random.split(key, 5)

    attr_t = jax.random.normal(k_attr, (B, ATTR), jnp.float32)
    sptm_t = jax.random.normal(k_sptm_t, (B, SPTM), jnp.float32)
    sptm_s0 = jax.random.normal(k_sptm_s, (L, SPTM), jnp.float32)  # sptm_s[0]
    sptm_l = jnp.full((B,), L // B, jnp.int32)                     # lengths

    params = init_params(k_params, ATTR, SPTM, HID, NUM_FCS)

    # 1) f32 compute path: exact-math check against the f32 reference.
    e32, (l32, lens) = net_forward(attr_t, sptm_s0, sptm_l, sptm_t, params,
                                   training=True, compute_dtype=jnp.float32)
    jax.block_until_ready((e32, l32, lens))
    ref_e32 = _ref_entire(attr_t, sptm_t, params["entire"], jnp.float32)
    ref_l32 = _ref_local(sptm_s0, params["local"], jnp.float32)
    assert e32.shape == (B, 1) and l32.shape == (L, 1)
    assert jnp.allclose(e32, ref_e32, atol=1e-4, rtol=1e-4)
    assert jnp.allclose(l32, ref_l32, atol=1e-4, rtol=1e-4)

    # 2) default bf16-operand path (v6e/v7x MXU fast path), checked against a
    #    reference that casts matmul operands identically.
    e16, (l16, _) = net_forward(attr_t, sptm_s0, sptm_l, sptm_t, params,
                                training=True)
    jax.block_until_ready((e16, l16))
    ref_e16 = _ref_entire(attr_t, sptm_t, params["entire"], jnp.bfloat16)
    ref_l16 = _ref_local(sptm_s0, params["local"], jnp.bfloat16)
    assert jnp.allclose(e16, ref_e16, atol=5e-3, rtol=5e-3)
    assert jnp.allclose(l16, ref_l16, atol=5e-3, rtol=5e-3)

    # 3) eval-mode path (entire head only, no local estimator).
    eval_out = net_forward(attr_t, sptm_s0, sptm_l, sptm_t, params,
                           training=False)
    jax.block_until_ready(eval_out)
    assert jnp.allclose(eval_out, ref_e16, atol=5e-3, rtol=5e-3)

    # 4) multi-tile "production size" path: exercises the row-tiled grid,
    #    VMEM-resident weights and the "parallel" row axis.
    BIG_B, BIG_L = 2 * _ROW_TILE, 3 * _ROW_TILE
    kb1, kb2 = jax.random.split(k_big)
    big_attr = jax.random.normal(kb1, (BIG_B, ATTR), jnp.float32)
    big_sptm_t = jax.random.normal(kb2, (BIG_B, SPTM), jnp.float32)
    big_sptm_s0 = jax.random.normal(kb1, (BIG_L, SPTM), jnp.float32)
    big_lens = jnp.full((BIG_B,), BIG_L // BIG_B, jnp.int32)
    be, (bl, _) = net_forward(big_attr, big_sptm_s0, big_lens, big_sptm_t,
                              params, training=True)
    jax.block_until_ready((be, bl))
    ref_be = _ref_entire(big_attr, big_sptm_t, params["entire"], jnp.bfloat16)
    ref_bl = _ref_local(big_sptm_s0, params["local"], jnp.bfloat16)
    assert be.shape == (BIG_B, 1) and bl.shape == (BIG_L, 1)
    assert jnp.allclose(be, ref_be, atol=5e-3, rtol=5e-3)
    assert jnp.allclose(bl, ref_bl, atol=5e-3, rtol=5e-3)

    print("KERNEL_OK")
</pallas_src>

<mosaic_0001>
module attributes {stable_mosaic.version = 11 : i64} {
  func.func @_local_kernel(%arg0: i32, %arg1: memref<16x32xf32, #tpu.memory_space<vmem>>, %arg2: memref<32x64xf32, #tpu.memory_space<vmem>>, %arg3: memref<1x64xf32, #tpu.memory_space<vmem>>, %arg4: memref<64x32xf32, #tpu.memory_space<vmem>>, %arg5: memref<1x32xf32, #tpu.memory_space<vmem>>, %arg6: memref<8x32xf32, #tpu.memory_space<vmem>>, %arg7: memref<1x1xf32, #tpu.memory_space<vmem>>, %arg8: memref<8x16xf32, #tpu.memory_space<vmem>>) attributes {dimension_semantics = [#tpu.dimension_semantics<parallel>], iteration_bounds = array<i64: 1>, scalar_prefetch = 0 : i64, scratch_operands = 0 : i64, tpu.core_type = #tpu.core_type<tc>, window_params = [{transform_indices = @transform_0, window_bounds = array<i64: 16, 32>}, {pipeline_mode = #tpu.pipeline_mode<synchronous>, transform_indices = @transform_1, window_bounds = array<i64: 32, 64>}, {pipeline_mode = #tpu.pipeline_mode<synchronous>, transform_indices = @transform_2, window_bounds = array<i64: 1, 64>}, {pipeline_mode = #tpu.pipeline_mode<synchronous>, transform_indices = @transform_3, window_bounds = array<i64: 64, 32>}, {pipeline_mode = #tpu.pipeline_mode<synchronous>, transform_indices = @transform_4, window_bounds = array<i64: 1, 32>}, {pipeline_mode = #tpu.pipeline_mode<synchronous>, transform_indices = @transform_5, window_bounds = array<i64: 8, 32>}, {pipeline_mode = #tpu.pipeline_mode<synchronous>, transform_indices = @transform_6, window_bounds = array<i64: 1, 1>}, {transform_indices = @transform_7, window_bounds = array<i64: 8, 16>}]} {
    %c0 = arith.constant 0 : index
    %c0_0 = arith.constant 0 : index
    %0 = vector.load %arg1[%c0, %c0_0] : memref<16x32xf32, #tpu.memory_space<vmem>>, vector<16x32xf32>
    %c0_1 = arith.constant 0 : index
    %c0_2 = arith.constant 0 : index
    %1 = vector.load %arg2[%c0_1, %c0_2] : memref<32x64xf32, #tpu.memory_space<vmem>>, vector<32x64xf32>
    %cst = arith.constant dense<0.000000e+00> : vector<16x64xf32>
    %2 = tpu.matmul %0, %1, %cst {dimension_numbers = #tpu.dot_dimension_numbers<[1], [0], [0], [1], [0, 0, 1, 1], [], []>} : vector<16x32xf32>, vector<32x64xf32>, vector<16x64xf32> -> vector<16x64xf32>
    %c0_3 = arith.constant 0 : index
    %c0_4 = arith.constant 0 : index
    %3 = vector.load %arg3[%c0_3, %c0_4] : memref<1x64xf32, #tpu.memory_space<vmem>>, vector<1x64xf32>
    %4 = vector.broadcast %3 : vector<1x64xf32> to vector<16x64xf32>
    %5 = arith.addf %2, %4 : vector<16x64xf32>
    %cst_5 = arith.constant 0.00999999977 : f32
    %6 = vector.broadcast %cst_5 : f32 to vector<16x64xf32>
    %7 = arith.mulf %6, %5 : vector<16x64xf32>
    %8 = arith.maximumf %5, %7 : vector<16x64xf32>
    %c0_6 = arith.constant 0 : index
    %c0_7 = arith.constant 0 : index
    %9 = vector.load %arg4[%c0_6, %c0_7] : memref<64x32xf32, #tpu.memory_space<vmem>>, vector<64x32xf32>
    %cst_8 = arith.constant dense<0.000000e+00> : vector<16x32xf32>
    %10 = tpu.matmul %8, %9, %cst_8 {dimension_numbers = #tpu.dot_dimension_numbers<[1], [0], [0], [1], [0, 0, 1, 1], [], []>} : vector<16x64xf32>, vector<64x32xf32>, vector<16x32xf32> -> vector<16x32xf32>
    %c0_9 = arith.constant 0 : index
    %c0_10 = arith.constant 0 : index
    %11 = vector.load %arg5[%c0_9, %c0_10] : memref<1x32xf32, #tpu.memory_space<vmem>>, vector<1x32xf32>
    %12 = vector.broadcast %11 : vector<1x32xf32> to vector<16x32xf32>
    %13 = arith.addf %10, %12 : vector<16x32xf32>
    %cst_11 = arith.constant 0.00999999977 : f32
    %14 = vector.broadcast %cst_11 : f32 to vector<16x32xf32>
    %15 = arith.mulf %14, %13 : vector<16x32xf32>
    %16 = arith.maximumf %13, %15 : vector<16x32xf32>
    %c0_12 = arith.constant 0 : index
    %c0_13 = arith.constant 0 : index
    %17 = vector.load %arg6[%c0_12, %c0_13] : memref<8x32xf32, #tpu.memory_space<vmem>>, vector<8x32xf32>
    %cst_14 = arith.constant dense<0.000000e+00> : vector<8x16xf32>
    %18 = tpu.matmul %17, %16, %cst_14 {dimension_numbers = #tpu.dot_dimension_numbers<[1], [1], [0], [0], [0, 0, 1, 0], [], []>} : vector<8x32xf32>, vector<16x32xf32>, vector<8x16xf32> -> vector<8x16xf32>
    %c0_15 = arith.constant 0 : index
    %c0_16 = arith.constant 0 : index
    %19 = vector.load %arg7[%c0_15, %c0_16] : memref<1x1xf32, #tpu.memory_space<vmem>>, vector<1x1xf32>
    %20 = vector.broadcast %19 : vector<1x1xf32> to vector<8x16xf32>
    %21 = arith.addf %18, %20 : vector<8x16xf32>
    %c0_17 = arith.constant 0 : index
    %c0_18 = arith.constant 0 : index
    %22 = vector.load %arg8[%c0_17, %c0_18] : memref<8x16xf32, #tpu.memory_space<vmem>>, vector<8x16xf32>
    tpu.vector_store %arg8[%c0_17, %c0_18], %21 {strides = array<i32>} : memref<8x16xf32, #tpu.memory_space<vmem>>, vector<8x16xf32>,
    return
  }
  func.func @transform_0(%arg0: i32) -> (i32, i32) {
    %c0_i32 = arith.constant 0 : i32
    %c0_i32_0 = arith.constant 0 : i32
    return %arg0, %c0_i32 : i32, i32
  }
  func.func @transform_1(%arg0: i32) -> (i32, i32) {
    %c0_i32 = arith.constant 0 : i32
    %c0_i32_0 = arith.constant 0 : i32
    %c0_i32_1 = arith.constant 0 : i32
    return %c0_i32, %c0_i32_0 : i32, i32
  }
  func.func @transform_2(%arg0: i32) -> (i32, i32) {
    %c0_i32 = arith.constant 0 : i32
    %c0_i32_0 = arith.constant 0 : i32
    %c0_i32_1 = arith.constant 0 : i32
    return %c0_i32, %c0_i32_0 : i32, i32
  }
  func.func @transform_3(%arg0: i32) -> (i32, i32) {
    %c0_i32 = arith.constant 0 : i32
    %c0_i32_0 = arith.constant 0 : i32
    %c0_i32_1 = arith.constant 0 : i32
    return %c0_i32, %c0_i32_0 : i32, i32
  }
  func.func @transform_4(%arg0: i32) -> (i32, i32) {
    %c0_i32 = arith.constant 0 : i32
    %c0_i32_0 = arith.constant 0 : i32
    %c0_i32_1 = arith.constant 0 : i32
    return %c0_i32, %c0_i32_0 : i32, i32
  }
  func.func @transform_5(%arg0: i32) -> (i32, i32) {
    %c0_i32 = arith.constant 0 : i32
    %c0_i32_0 = arith.constant 0 : i32
    %c0_i32_1 = arith.constant 0 : i32
    return %c0_i32, %c0_i32_0 : i32, i32
  }
  func.func @transform_6(%arg0: i32) -> (i32, i32) {
    %c0_i32 = arith.constant 0 : i32
    %c0_i32_0 = arith.constant 0 : i32
    %c0_i32_1 = arith.constant 0 : i32
    return %c0_i32, %c0_i32_0 : i32, i32
  }
  func.func @transform_7(%arg0: i32) -> (i32, i32) {
    %c0_i32 = arith.constant 0 : i32
    %c0_i32_0 = arith.constant 0 : i32
    return %c0_i32, %arg0 : i32, i32
  }
}

module attributes {stable_mosaic.version = 11 : i64} {
  func.func @_entire_kernel(%arg0: i32, %arg1: memref<8x48xf32, #tpu.memory_space<vmem>>, %arg2: memref<48x128xf32, #tpu.memory_space<vmem>>, %arg3: memref<1x128xf32, #tpu.memory_space<vmem>>, %arg4: memref<3x128x128xf32, #tpu.memory_space<vmem>>, %arg5: memref<3x1x128xf32, #tpu.memory_space<vmem>>, %arg6: memref<8x128xf32, #tpu.memory_space<vmem>>, %arg7: memref<1x1xf32, #tpu.memory_space<vmem>>, %arg8: memref<8x8xf32, #tpu.memory_space<vmem>>) attributes {dimension_semantics = [#tpu.dimension_semantics<parallel>], iteration_bounds = array<i64: 1>, scalar_prefetch = 0 : i64, scratch_operands = 0 : i64, tpu.core_type = #tpu.core_type<tc>, window_params = [{transform_indices = @transform_0, window_bounds = array<i64: 8, 48>}, {pipeline_mode = #tpu.pipeline_mode<synchronous>, transform_indices = @transform_1, window_bounds = array<i64: 48, 128>}, {pipeline_mode = #tpu.pipeline_mode<synchronous>, transform_indices = @transform_2, window_bounds = array<i64: 1, 128>}, {pipeline_mode = #tpu.pipeline_mode<synchronous>, transform_indices = @transform_3, window_bounds = array<i64: 3, 128, 128>}, {pipeline_mode = #tpu.pipeline_mode<synchronous>, transform_indices = @transform_4, window_bounds = array<i64: 3, 1, 128>}, {pipeline_mode = #tpu.pipeline_mode<synchronous>, transform_indices = @transform_5, window_bounds = array<i64: 8, 128>}, {pipeline_mode = #tpu.pipeline_mode<synchronous>, transform_indices = @transform_6, window_bounds = array<i64: 1, 1>}, {transform_indices = @transform_7, window_bounds = array<i64: 8, 8>}]} {
    %c0 = arith.constant 0 : index
    %c0_0 = arith.constant 0 : index
    %0 = vector.load %arg1[%c0, %c0_0] : memref<8x48xf32, #tpu.memory_space<vmem>>, vector<8x48xf32>
    %c0_1 = arith.constant 0 : index
    %c0_2 = arith.constant 0 : index
    %1 = vector.load %arg2[%c0_1, %c0_2] : memref<48x128xf32, #tpu.memory_space<vmem>>, vector<48x128xf32>
    %cst = arith.constant dense<0.000000e+00> : vector<8x128xf32>
    %2 = tpu.matmul %0, %1, %cst {dimension_numbers = #tpu.dot_dimension_numbers<[1], [0], [0], [1], [0, 0, 1, 1], [], []>} : vector<8x48xf32>, vector<48x128xf32>, vector<8x128xf32> -> vector<8x128xf32>
    %c0_3 = arith.constant 0 : index
    %c0_4 = arith.constant 0 : index
    %3 = vector.load %arg3[%c0_3, %c0_4] : memref<1x128xf32, #tpu.memory_space<vmem>>, vector<1x128xf32>
    %4 = vector.broadcast %3 : vector<1x128xf32> to vector<8x128xf32>
    %5 = arith.addf %2, %4 : vector<8x128xf32>
    %cst_5 = arith.constant 0.00999999977 : f32
    %6 = vector.broadcast %cst_5 : f32 to vector<8x128xf32>
    %7 = arith.mulf %6, %5 : vector<8x128xf32>
    %8 = arith.maximumf %5, %7 : vector<8x128xf32>
    %c0_i32 = arith.constant 0 : i32
    %9 = arith.index_cast %c0_i32 : i32 to index
    %c0_6 = arith.constant 0 : index
    %c0_7 = arith.constant 0 : index
    %10 = vector.load %arg4[%9, %c0_6, %c0_7] : memref<3x128x128xf32, #tpu.memory_space<vmem>>, vector<1x128x128xf32>
    %11 = vector.shape_cast %10 : vector<1x128x128xf32> to vector<128x128xf32>
    %cst_8 = arith.constant dense<0.000000e+00> : vector<8x128xf32>
    %12 = tpu.matmul %8, %11, %cst_8 {dimension_numbers = #tpu.dot_dimension_numbers<[1], [0], [0], [1], [0, 0, 1, 1], [], []>} : vector<8x128xf32>, vector<128x128xf32>, vector<8x128xf32> -> vector<8x128xf32>
    %13 = arith.index_cast %c0_i32 : i32 to index
    %c0_9 = arith.constant 0 : index
    %c0_10 = arith.constant 0 : index
    %14 = vector.load %arg5[%13, %c0_9, %c0_10] : memref<3x1x128xf32, #tpu.memory_space<vmem>>, vector<1x1x128xf32>
    %15 = vector.shape_cast %14 : vector<1x1x128xf32> to vector<1x128xf32>
    %16 = vector.broadcast %15 : vector<1x128xf32> to vector<8x128xf32>
    %17 = arith.addf %12, %16 : vector<8x128xf32>
    %cst_11 = arith.constant 0.00999999977 : f32
    %18 = vector.broadcast %cst_11 : f32 to vector<8x128xf32>
    %19 = arith.mulf %18, %17 : vector<8x128xf32>
    %20 = arith.maximumf %17, %19 : vector<8x128xf32>
    %21 = arith.addf %8, %20 : vector<8x128xf32>
    %c1_i32 = arith.constant 1 : i32
    %22 = arith.index_cast %c1_i32 : i32 to index
    %c0_12 = arith.constant 0 : index
    %c0_13 = arith.constant 0 : index
    %23 = vector.load %arg4[%22, %c0_12, %c0_13] : memref<3x128x128xf32, #tpu.memory_space<vmem>>, vector<1x128x128xf32>
    %24 = vector.shape_cast %23 : vector<1x128x128xf32> to vector<128x128xf32>
    %cst_14 = arith.constant dense<0.000000e+00> : vector<8x128xf32>
    %25 = tpu.matmul %21, %24, %cst_14 {dimension_numbers = #tpu.dot_dimension_numbers<[1], [0], [0], [1], [0, 0, 1, 1], [], []>} : vector<8x128xf32>, vector<128x128xf32>, vector<8x128xf32> -> vector<8x128xf32>
    %26 = arith.index_cast %c1_i32 : i32 to index
    %c0_15 = arith.constant 0 : index
    %c0_16 = arith.constant 0 : index
    %27 = vector.load %arg5[%26, %c0_15, %c0_16] : memref<3x1x128xf32, #tpu.memory_space<vmem>>, vector<1x1x128xf32>
    %28 = vector.shape_cast %27 : vector<1x1x128xf32> to vector<1x128xf32>
    %29 = vector.broadcast %28 : vector<1x128xf32> to vector<8x128xf32>
    %30 = arith.addf %25, %29 : vector<8x128xf32>
    %cst_17 = arith.constant 0.00999999977 : f32
    %31 = vector.broadcast %cst_17 : f32 to vector<8x128xf32>
    %32 = arith.mulf %31, %30 : vector<8x128xf32>
    %33 = arith.maximumf %30, %32 : vector<8x128xf32>
    %34 = arith.addf %21, %33 : vector<8x128xf32>
    %c2_i32 = arith.constant 2 : i32
    %35 = arith.index_cast %c2_i32 : i32 to index
    %c0_18 = arith.constant 0 : index
    %c0_19 = arith.constant 0 : index
    %36 = vector.load %arg4[%35, %c0_18, %c0_19] : memref<3x128x128xf32, #tpu.memory_space<vmem>>, vector<1x128x128xf32>
    %37 = vector.shape_cast %36 : vector<1x128x128xf32> to vector<128x128xf32>
    %cst_20 = arith.constant dense<0.000000e+00> : vector<8x128xf32>
    %38 = tpu.matmul %34, %37, %cst_20 {dimension_numbers = #tpu.dot_dimension_numbers<[1], [0], [0], [1], [0, 0, 1, 1], [], []>} : vector<8x128xf32>, vector<128x128xf32>, vector<8x128xf32> -> vector<8x128xf32>
    %39 = arith.index_cast %c2_i32 : i32 to index
    %c0_21 = arith.constant 0 : index
    %c0_22 = arith.constant 0 : index
    %40 = vector.load %arg5[%39, %c0_21, %c0_22] : memref<3x1x128xf32, #tpu.memory_space<vmem>>, vector<1x1x128xf32>
    %41 = vector.shape_cast %40 : vector<1x1x128xf32> to vector<1x128xf32>
    %42 = vector.broadcast %41 : vector<1x128xf32> to vector<8x128xf32>
    %43 = arith.addf %38, %42 : vector<8x128xf32>
    %cst_23 = arith.constant 0.00999999977 : f32
    %44 = vector.broadcast %cst_23 : f32 to vector<8x128xf32>
    %45 = arith.mulf %44, %43 : vector<8x128xf32>
    %46 = arith.maximumf %43, %45 : vector<8x128xf32>
    %47 = arith.addf %34, %46 : vector<8x128xf32>
    %c3_i32 = arith.constant 3 : i32
    %c0_24 = arith.constant 0 : index
    %c0_25 = arith.constant 0 : index
    %48 = vector.load %arg6[%c0_24, %c0_25] : memref<8x128xf32, #tpu.memory_space<vmem>>, vector<8x128xf32>
    %cst_26 = arith.constant dense<0.000000e+00> : vector<8x8xf32>
    %49 = tpu.matmul %48, %47, %cst_26 {dimension_numbers = #tpu.dot_dimension_numbers<[1], [1], [0], [0], [0, 0, 1, 0], [], []>} : vector<8x128xf32>, vector<8x128xf32>, vector<8x8xf32> -> vector<8x8xf32>
    %c0_27 = arith.constant 0 : index
    %c0_28 = arith.constant 0 : index
    %50 = vector.load %arg7[%c0_27, %c0_28] : memref<1x1xf32, #tpu.memory_space<vmem>>, vector<1x1xf32>
    %51 = vector.broadcast %50 : vector<1x1xf32> to vector<8x8xf32>
    %52 = arith.addf %49, %51 : vector<8x8xf32>
    %c0_29 = arith.constant 0 : index
    %c0_30 = arith.constant 0 : index
    %53 = vector.load %arg8[%c0_29, %c0_30] : memref<8x8xf32, #tpu.memory_space<vmem>>, vector<8x8xf32>
    tpu.vector_store %arg8[%c0_29, %c0_30], %52 {strides = array<i32>} : memref<8x8xf32, #tpu.memory_space<vmem>>, vector<8x8xf32>,
    return
  }
  func.func @transform_0(%arg0: i32) -> (i32, i32) {
    %c0_i32 = arith.constant 0 : i32
    %c0_i32_0 = arith.constant 0 : i32
    return %arg0, %c0_i32 : i32, i32
  }
  func.func @transform_1(%arg0: i32) -> (i32, i32) {
    %c0_i32 = arith.constant 0 : i32
    %c0_i32_0 = arith.constant 0 : i32
    %c0_i32_1 = arith.constant 0 : i32
    return %c0_i32, %c0_i32_0 : i32, i32
  }
  func.func @transform_2(%arg0: i32) -> (i32, i32) {
    %c0_i32 = arith.constant 0 : i32
    %c0_i32_0 = arith.constant 0 : i32
    %c0_i32_1 = arith.constant 0 : i32
    return %c0_i32, %c0_i32_0 : i32, i32
  }
  func.func @transform_3(%arg0: i32) -> (i32, i32, i32) {
    %c0_i32 = arith.constant 0 : i32
    %c0_i32_0 = arith.constant 0 : i32
    %c0_i32_1 = arith.constant 0 : i32
    %c0_i32_2 = arith.constant 0 : i32
    return %c0_i32, %c0_i32_0, %c0_i32_1 : i32, i32, i32
  }
  func.func @transform_4(%arg0: i32) -> (i32, i32, i32) {
    %c0_i32 = arith.constant 0 : i32
    %c0_i32_0 = arith.constant 0 : i32
    %c0_i32_1 = arith.constant 0 : i32
    %c0_i32_2 = arith.constant 0 : i32
    return %c0_i32, %c0_i32_0, %c0_i32_1 : i32, i32, i32
  }
  func.func @transform_5(%arg0: i32) -> (i32, i32) {
    %c0_i32 = arith.constant 0 : i32
    %c0_i32_0 = arith.constant 0 : i32
    %c0_i32_1 = arith.constant 0 : i32
    return %c0_i32, %c0_i32_0 : i32, i32
  }
  func.func @transform_6(%arg0: i32) -> (i32, i32) {
    %c0_i32 = arith.constant 0 : i32
    %c0_i32_0 = arith.constant 0 : i32
    %c0_i32_1 = arith.constant 0 : i32
    return %c0_i32, %c0_i32_0 : i32, i32
  }
  func.func @transform_7(%arg0: i32) -> (i32, i32) {
    %c0_i32 = arith.constant 0 : i32
    %c0_i32_0 = arith.constant 0 : i32
    return %c0_i32, %arg0 : i32, i32
  }
}

</mosaic_0001>

<llo_original>
// kernel: net_forward.3
$region0: #{net_forward.3}
  #allocation0 [shape = 'u32[]', space=smem, size = 0x4, offset = 0x4, fixed_abs, tag = 'smem constant byte address 0x4 - core index']
  #allocation1 [shape = 'u32[144,128]{1,0:T(1,128)}', space=vmem, size = 0x12000, scoped, tag = 'internal scratch']
  #allocation2 [shape = 'f32[1,1]{1,0:T(1,128)S(1)}', space=vmem, size = 0x200, scoped, tag = 'scoped memory for net_forward.3']
  %s0 = inlined_call_operand.vmem [shape: f32[16,32], index: 0, kind: input, shape index: {}]
  %s1 = inlined_call_operand.vmem [shape: f32[32,64], index: 1, kind: input, shape index: {}]
  %s2 = inlined_call_operand.vmem [shape: f32[1,64], index: 2, kind: input, shape index: {}]
  %s3 = inlined_call_operand.vmem [shape: f32[64,32], index: 3, kind: input, shape index: {}]
  %s4 = inlined_call_operand.vmem [shape: f32[1,32], index: 4, kind: input, shape index: {}]
  %s5 = inlined_call_operand.vmem [shape: f32[8,32], index: 5, kind: input, shape index: {}]
  %s6 = inlined_call_operand.<no memory space> [shape: f32[1,1], index: 6, kind: input, shape index: {}]
  %s7 = inlined_call_operand.vmem [shape: f32[8,16], index: 7, kind: output, shape index: {}]
  %s8 = sld [smem:[#allocation0]]
  $region38: #{net_forward.3} parent=0
    _
  %s10 = ssub.s32 1, %s8
  %s11 = scalar_select 0, %s10, %s8
  %v12 = vstv %s6
  %13 = vst [vmem:[#allocation2] sm:$0x1] %v12
  // Predicated region
  $region2: #{net_forward.3} parent=0 // pred_check
    _
  $region3: #{net_forward.3} parent=0 // pred_check_branch
    %15 = sbr.rel (0) target = $region5
  $region4: #{net_forward.3} parent=0 // pred_region
    _
  $region5: #{net_forward.3} parent=0 // pred_fallthru
    _
  // Predicated region
  $region6: #{net_forward.3} parent=0 // pred_check
    _
  $region7: #{net_forward.3} parent=0 // pred_check_branch
    %17 = sbr.rel (0) target = $region9
  $region8: #{net_forward.3} parent=0 // pred_region
    _
  $region9: #{net_forward.3} parent=0 // pred_fallthru
    _
  // Predicated region
  $region10: #{net_forward.3} parent=0 // pred_check
    _
  $region11: #{net_forward.3} parent=0 // pred_check_branch
    %19 = sbr.rel (0) target = $region13
  $region12: #{net_forward.3} parent=0 // pred_region
    _
  $region13: #{net_forward.3} parent=0 // pred_fallthru
    _
  // Predicated region
  $region14: #{net_forward.3} parent=0 // pred_check
    _
  $region15: #{net_forward.3} parent=0 // pred_check_branch
    %21 = sbr.rel (0) target = $region17
  $region16: #{net_forward.3} parent=0 // pred_region
    _
  $region17: #{net_forward.3} parent=0 // pred_fallthru
    _
  // Predicated region
  $region18: #{net_forward.3} parent=0 // pred_check
    _
  $region19: #{net_forward.3} parent=0 // pred_check_branch
    %23 = sbr.rel (0) target = $region21
  $region20: #{net_forward.3} parent=0 // pred_region
    _
  $region21: #{net_forward.3} parent=0 // pred_fallthru
    _
  // Predicated region
  $region22: #{net_forward.3} parent=0 // pred_check
    _
  $region23: #{net_forward.3} parent=0 // pred_check_branch
    %25 = sbr.rel (0) target = $region25
  $region24: #{net_forward.3} parent=0 // pred_region
    _
  $region25: #{net_forward.3} parent=0 // pred_fallthru
    _
  // Predicated region
  $region26: #{net_forward.3} parent=0 // pred_check
    _
  $region27: #{net_forward.3} parent=0 // pred_check_branch
    %27 = sbr.rel (0) target = $region29
  $region28: #{net_forward.3} parent=0 // pred_region
    _
  $region29: #{net_forward.3} parent=0 // pred_fallthru
    _
  %v28 = vld [vmem:[%s0] sm:$0xff]
  %v29 = vld [vmem:[%s0 + $0x8] sm:$0xff]
  %v30 = vld [vmem:[%s1] sm:$0xff]
  %v31 = vld [vmem:[%s1 + $0x8] sm:$0xff]
  %v32 = vld [vmem:[%s1 + $0x10] sm:$0xff]
  %v33 = vld [vmem:[%s1 + $0x18] sm:$0xff]
  %v34 = vld [vmem:[%s2] sm:$0x1]
  %v36 = vlaneseq
  %v37 = vshrl.u32 %v36, 7
  %v38 = vsub.s32 0, %v37
  %v39 = vrot.slane %v34, %v38
  %vm41 = vcmask 261120
  %v43 = vsel %vm41, %v28, 0
  %v46 = vsel %vm41, %v29, 0
  %48 = vmatprep.subr.mxu0 0.0
  %49 = vmatpush1.msra.mxu0 %v30
  %50 = vmatprep.subr.mxu0 0.0
  %51 = vmatpush1.msra.mxu0 %v31
  %52 = vmatprep.subr.mxu0 0.0
  %53 = vmatpush1.msra.mxu0 %v32
  %54 = vmatprep.subr.mxu0 0.0
  %55 = vmatpush1.msra.mxu0 %v33
  %56 = vmatprep.subr.mxu0 0.0
  %57 = vmatpush1.msra.mxu0 0.0
  %58 = vmatprep.subr.mxu0 0.0
  %59 = vmatpush1.msra.mxu0 0.0
  %60 = vmatprep.subr.mxu0 0.0
  %61 = vmatpush1.msra.mxu0 0.0
  %62 = vmatprep.subr.mxu0 0.0
  %63 = vmatpush1.msra.mxu0 0.0
  %64 = vmatprep.subr.mxu0 0.0
  %65 = vmatpush1.msra.mxu0 0.0
  %66 = vmatprep.subr.mxu0 0.0
  %67 = vmatpush1.msra.mxu0 0.0
  %68 = vmatprep.subr.mxu0 0.0
  %69 = vmatpush1.msra.mxu0 0.0
  %70 = vmatprep.subr.mxu0 0.0
  %71 = vmatpush1.msra.mxu0 0.0
  %72 = vmatprep.subr.mxu0 0.0
  %73 = vmatpush1.msra.mxu0 0.0
  %74 = vmatprep.subr.mxu0 0.0
  %75 = vmatpush1.msra.mxu0 0.0
  %76 = vmatprep.subr.mxu0 0.0
  %77 = vmatpush1.msra.mxu0 0.0
  %78 = vmatprep.subr.mxu0 0.0
  %79 = vmatpush1.msra.mxu0 0.0
  %80 = vmatprep.subr.mxu0 0.0
  %81 = vmatpush1.msra.mxu0 0.0
  %82 = vmatprep.subr.mxu0 0.0
  %83 = vmatpush1.msra.mxu0 0.0
  %84 = vmatprep.subr.mxu0 0.0
  %85 = vmatpush1.msra.mxu0 0.0
  %86 = vmatprep.subr.mxu0 0.0
  %87 = vmatpush1.msra.mxu0 0.0
  %88 = vmatprep.subr.mxu0 0.0
  %89 = vmatpush1.msra.mxu0 0.0
  %90 = vmatprep.subr.mxu0 0.0
  %91 = vmatpush1.msra.mxu0 0.0
  %92 = vmatprep.subr.mxu0 0.0
  %93 = vmatpush1.msra.mxu0 0.0
  %94 = vmatprep.subr.mxu0 0.0
  %95 = vmatpush1.msra.mxu0 0.0
  %96 = vmatprep.subr.mxu0 0.0
  %97 = vmatpush1.msra.mxu0 0.0
  %98 = vmatprep.subr.mxu0 0.0
  %99 = vmatpush1.msra.mxu0 0.0
  %100 = vmatprep.subr.mxu0 0.0
  %101 = vmatpush1.msra.mxu0 0.0
  %102 = vmatprep.subr.mxu0 0.0
  %103 = vmatpush1.msra.mxu0 0.0
  %104 = vmatprep.subr.mxu0 0.0
  %105 = vmatpush1.msra.mxu0 0.0
  %106 = vmatprep.subr.mxu0 0.0
  %107 = vmatpush1.msra.mxu0 0.0
  %108 = vmatprep.subr.mxu0 0.0
  %109 = vmatpush1.msra.mxu0 0.0
  %110 = vmatprep.subr.mxu0 0.0
  %111 = vmatpush1.msra.mxu0 0.0
  %112 = vmatprep.mubr.f32.mxu0 0.0
  %113 = vmatmul.mubr.f32.gmra.mrb[0].mxu0 %v43
  %v114 = vpop.f32.mrb[0].mxu0
  %v115 = vadd.f32 %v39, %v114
  %v116 = vpop.f32.mrb[0].mxu0
  %117 = vmatprep.mubr.f32.mxu0 0.0
  %118 = vmatmul.mubr.f32.gmra.mrb[0].mxu0 %v46
  %v119 = vpop.f32.mrb[0].mxu0
  %v120 = vadd.f32 %v39, %v119
  %v121 = vpop.f32.mrb[0].mxu0
  %122 = vdwg.mxu0
  %v123 = vmul.f32 %v115, 0.01
  %v124 = vmul.f32 %v120, 0.01
  %v125 = vmax.f32 %v115, %v123
  %v126 = vmax.f32 %v120, %v124
  %v127 = vld [vmem:[%s3] sm:$0xff]
  %v128 = vld [vmem:[%s3 + $0x8] sm:$0xff]
  %v129 = vld [vmem:[%s3 + $0x10] sm:$0xff]
  %v130 = vld [vmem:[%s3 + $0x18] sm:$0xff]
  %v131 = vld [vmem:[%s3 + $0x20] sm:$0xff]
  %v132 = vld [vmem:[%s3 + $0x28] sm:$0xff]
  %v133 = vld [vmem:[%s3 + $0x30] sm:$0xff]
  %v134 = vld [vmem:[%s3 + $0x38] sm:$0xff]
  %v135 = vld [vmem:[%s4] sm:$0x1]
  %v137 = vlaneseq
  %v138 = vshrl.u32 %v137, 7
  %v139 = vsub.s32 0, %v138
  %v140 = vrot.slane %v135, %v139
  %vm142 = vcmask 523264
  %v144 = vsel %vm142, %v125, 0
  %v147 = vsel %vm142, %v126, 0
  %149 = vmatprep.subr.mxu0 0.0
  %150 = vmatpush1.msra.mxu0 %v127
  %151 = vmatprep.subr.mxu0 0.0
  %152 = vmatpush1.msra.mxu0 %v128
  %153 = vmatprep.subr.mxu0 0.0
  %154 = vmatpush1.msra.mxu0 %v129
  %155 = vmatprep.subr.mxu0 0.0
  %156 = vmatpush1.msra.mxu0 %v130
  %157 = vmatprep.subr.mxu0 0.0
  %158 = vmatpush1.msra.mxu0 %v131
  %159 = vmatprep.subr.mxu0 0.0
  %160 = vmatpush1.msra.mxu0 %v132
  %161 = vmatprep.subr.mxu0 0.0
  %162 = vmatpush1.msra.mxu0 %v133
  %163 = vmatprep.subr.mxu0 0.0
  %164 = vmatpush1.msra.mxu0 %v134
  %165 = vmatprep.subr.mxu0 0.0
  %166 = vmatpush1.msra.mxu0 0.0
  %167 = vmatprep.subr.mxu0 0.0
  %168 = vmatpush1.msra.mxu0 0.0
  %169 = vmatprep.subr.mxu0 0.0
  %170 = vmatpush1.msra.mxu0 0.0
  %171 = vmatprep.subr.mxu0 0.0
  %172 = vmatpush1.msra.mxu0 0.0
  %173 = vmatprep.subr.mxu0 0.0
  %174 = vmatpush1.msra.mxu0 0.0
  %175 = vmatprep.subr.mxu0 0.0
  %176 = vmatpush1.msra.mxu0 0.0
  %177 = vmatprep.subr.mxu0 0.0
  %178 = vmatpush1.msra.mxu0 0.0
  %179 = vmatprep.subr.mxu0 0.0
  %180 = vmatpush1.msra.mxu0 0.0
  %181 = vmatprep.subr.mxu0 0.0
  %182 = vmatpush1.msra.mxu0 0.0
  %183 = vmatprep.subr.mxu0 0.0
  %184 = vmatpush1.msra.mxu0 0.0
  %185 = vmatprep.subr.mxu0 0.0
  %186 = vmatpush1.msra.mxu0 0.0
  %187 = vmatprep.subr.mxu0 0.0
  %188 = vmatpush1.msra.mxu0 0.0
  %189 = vmatprep.subr.mxu0 0.0
  %190 = vmatpush1.msra.mxu0 0.0
  %191 = vmatprep.subr.mxu0 0.0
  %192 = vmatpush1.msra.mxu0 0.0
  %193 = vmatprep.subr.mxu0 0.0
  %194 = vmatpush1.msra.mxu0 0.0
  %195 = vmatprep.subr.mxu0 0.0
  %196 = vmatpush1.msra.mxu0 0.0
  %197 = vmatprep.subr.mxu0 0.0
  %198 = vmatpush1.msra.mxu0 0.0
  %199 = vmatprep.subr.mxu0 0.0
  %200 = vmatpush1.msra.mxu0 0.0
  %201 = vmatprep.subr.mxu0 0.0
  %202 = vmatpush1.msra.mxu0 0.0
  %203 = vmatprep.subr.mxu0 0.0
  %204 = vmatpush1.msra.mxu0 0.0
  %205 = vmatprep.subr.mxu0 0.0
  %206 = vmatpush1.msra.mxu0 0.0
  %207 = vmatprep.subr.mxu0 0.0
  %208 = vmatpush1.msra.mxu0 0.0
  %209 = vmatprep.subr.mxu0 0.0
  %210 = vmatpush1.msra.mxu0 0.0
  %211 = vmatprep.subr.mxu0 0.0
  %212 = vmatpush1.msra.mxu0 0.0
  %213 = vmatprep.mubr.f32.mxu0 0.0
  %214 = vmatmul.mubr.f32.gmra.mrb[0].mxu0 %v144
  %v215 = vpop.f32.mrb[0].mxu0
  %v216 = vadd.f32 %v140, %v215
  %v217 = vpop.f32.mrb[0].mxu0
  %218 = vmatprep.mubr.f32.mxu0 0.0
  %219 = vmatmul.mubr.f32.gmra.mrb[0].mxu0 %v147
  %v220 = vpop.f32.mrb[0].mxu0
  %v221 = vadd.f32 %v140, %v220
  %v222 = vpop.f32.mrb[0].mxu0
  %223 = vdwg.mxu0
  %v224 = vmul.f32 %v216, 0.01
  %v225 = vmul.f32 %v221, 0.01
  %v226 = vmax.f32 %v216, %v224
  %v227 = vmax.f32 %v221, %v225
  %v228 = vld [vmem:[%s5] sm:$0xff]
  %v229 = vld [vmem:[#allocation2] sm:$0x1]
  %v231 = vlaneseq
  %v232 = vshrl.u32 %v231, 7
  %v233 = vsub.s32 0, %v232
  %v234 = vrot.slane %v229, %v233
  %235 = vset.pattern.permute.xlu0 0
  %236 = vperm.xlu0 %235, %v234
  %v237 = vpop.permute.xlu0 %236
  %v240 = vsel %vm41, %v228, 0
  %v243 = vsel %vm41, %v226, 0
  %v246 = vsel %vm41, %v227, 0
  %248 = vmatprep.subr.mxu0 0.0
  %249 = vmatpush1.xpose.msra.mxu0 %v243
  %250 = vmatprep.subr.mxu0 0.0
  %251 = vmatpush1.xpose.msra.mxu0 %v246
  %252 = vmatprep.subr.mxu0 0.0
  %253 = vmatpush1.xpose.msra.mxu0 0.0
  %254 = vmatprep.subr.mxu0 0.0
  %255 = vmatpush1.xpose.msra.mxu0 0.0
  %256 = vmatprep.subr.mxu0 0.0
  %257 = vmatpush1.xpose.msra.mxu0 0.0
  %258 = vmatprep.subr.mxu0 0.0
  %259 = vmatpush1.xpose.msra.mxu0 0.0
  %260 = vmatprep.subr.mxu0 0.0
  %261 = vmatpush1.xpose.msra.mxu0 0.0
  %262 = vmatprep.subr.mxu0 0.0
  %263 = vmatpush1.xpose.msra.mxu0 0.0
  %264 = vmatprep.subr.mxu0 0.0
  %265 = vmatpush1.xpose.msra.mxu0 0.0
  %266 = vmatprep.subr.mxu0 0.0
  %267 = vmatpush1.xpose.msra.mxu0 0.0
  %268 = vmatprep.subr.mxu0 0.0
  %269 = vmatpush1.xpose.msra.mxu0 0.0
  %270 = vmatprep.subr.mxu0 0.0
  %271 = vmatpush1.xpose.msra.mxu0 0.0
  %272 = vmatprep.subr.mxu0 0.0
  %273 = vmatpush1.xpose.msra.mxu0 0.0
  %274 = vmatprep.subr.mxu0 0.0
  %275 = vmatpush1.xpose.msra.mxu0 0.0
  %276 = vmatprep.subr.mxu0 0.0
  %277 = vmatpush1.xpose.msra.mxu0 0.0
  %278 = vmatprep.subr.mxu0 0.0
  %279 = vmatpush1.xpose.msra.mxu0 0.0
  %280 = vmatprep.subr.mxu0 0.0
  %281 = vmatpush1.xpose.msra.mxu0 0.0
  %282 = vmatprep.subr.mxu0 0.0
  %283 = vmatpush1.xpose.msra.mxu0 0.0
  %284 = vmatprep.subr.mxu0 0.0
  %285 = vmatpush1.xpose.msra.mxu0 0.0
  %286 = vmatprep.subr.mxu0 0.0
  %287 = vmatpush1.xpose.msra.mxu0 0.0
  %288 = vmatprep.subr.mxu0 0.0
  %289 = vmatpush1.xpose.msra.mxu0 0.0
  %290 = vmatprep.subr.mxu0 0.0
  %291 = vmatpush1.xpose.msra.mxu0 0.0
  %292 = vmatprep.subr.mxu0 0.0
  %293 = vmatpush1.xpose.msra.mxu0 0.0
  %294 = vmatprep.subr.mxu0 0.0
  %295 = vmatpush1.xpose.msra.mxu0 0.0
  %296 = vmatprep.subr.mxu0 0.0
  %297 = vmatpush1.xpose.msra.mxu0 0.0
  %298 = vmatprep.subr.mxu0 0.0
  %299 = vmatpush1.xpose.msra.mxu0 0.0
  %300 = vmatprep.subr.mxu0 0.0
  %301 = vmatpush1.xpose.msra.mxu0 0.0
  %302 = vmatprep.subr.mxu0 0.0
  %303 = vmatpush1.xpose.msra.mxu0 0.0
  %304 = vmatprep.subr.mxu0 0.0
  %305 = vmatpush1.xpose.msra.mxu0 0.0
  %306 = vmatprep.subr.mxu0 0.0
  %307 = vmatpush1.xpose.msra.mxu0 0.0
  %308 = vmatprep.subr.mxu0 0.0
  %309 = vmatpush1.xpose.msra.mxu0 0.0
  %310 = vmatprep.subr.mxu0 0.0
  %311 = vmatpush1.xpose.msra.mxu0 0.0
  %312 = vmatprep.mubr.f32.mxu0 0.0
  %313 = vmatmul.mubr.f32.gmra.mrb[0].mxu0 %v240
  %v314 = vpop.f32.mrb[0].mxu0
  %v315 = vadd.f32 %v237, %v314
  %v316 = vpop.f32.mrb[0].mxu0
  %317 = vdwg.mxu0
  %vm318 = vcmask 130048
  %319 = vst.msk [vmem:[%s7] sm:$0xff] %vm318, %v315
  // Predicated region
  $region30: #{net_forward.3} parent=0 // pred_check
    _
  $region31: #{net_forward.3} parent=0 // pred_check_branch
    %321 = sbr.rel (0) target = $region33
  $region32: #{net_forward.3} parent=0 // pred_region
    _
  $region33: #{net_forward.3} parent=0 // pred_fallthru
    _
  // Predicated region
  $region34: #{net_forward.3} parent=0 // pred_check
    _
  $region35: #{net_forward.3} parent=0 // pred_check_branch
    %323 = sbr.rel (0) target = $region37
  $region36: #{net_forward.3} parent=0 // pred_region
    _
  $region37: #{net_forward.3} parent=0 // pred_fallthru
    _

// kernel: net_forward.2
$region0: #{net_forward.2}
  #allocation0 [shape = 'u32[]', space=smem, size = 0x4, offset = 0x4, fixed_abs, tag = 'smem constant byte address 0x4 - core index']
  #allocation1 [shape = 'u32[144,128]{1,0:T(1,128)}', space=vmem, size = 0x12000, scoped, tag = 'internal scratch']
  #allocation2 [shape = 'f32[1,1]{1,0:T(1,128)S(1)}', space=vmem, size = 0x200, scoped, tag = 'scoped memory for net_forward.2']
  %s0 = inlined_call_operand.vmem [shape: f32[8,48], index: 0, kind: input, shape index: {}]
  %s1 = inlined_call_operand.vmem [shape: f32[48,128], index: 1, kind: input, shape index: {}]
  %s2 = inlined_call_operand.vmem [shape: f32[1,128], index: 2, kind: input, shape index: {}]
  %s3 = inlined_call_operand.hbm [shape: f32[3,128,128], index: 3, kind: input, shape index: {}]
  %s4 = inlined_call_operand.vmem [shape: f32[3,1,128], index: 4, kind: input, shape index: {}]
  %s5 = inlined_call_operand.vmem [shape: f32[8,128], index: 5, kind: input, shape index: {}]
  %s6 = inlined_call_operand.<no memory space> [shape: f32[1,1], index: 6, kind: input, shape index: {}]
  %s7 = inlined_call_operand.vmem [shape: f32[8,8], index: 7, kind: output, shape index: {}]
  %s8 = sld [smem:[#allocation0]]
  $region42: #{net_forward.2} parent=0
    _
  %s10 = ssub.s32 1, %s8
  %s11 = scalar_select 0, %s10, %s8
  %v12 = vstv %s6
  %13 = vst [vmem:[#allocation2] sm:$0x1] %v12
  $region1: #{net_forward.2} parent=0
    #allocation3 [shape = 'u8[196608]{0}', space=vmem, size = 0x30000, scoped, tag = 'input window, operand 3, single buffered']
    #allocation4 [shape = 's32[1]{0}', space=sflag, size = 0x4, scoped, tag = 'scoped memory for net_forward.2']
    %14 = vsyncpa [#allocation4], 0
    // Predicated region
    $region2: #{net_forward.2} parent=1 // pred_check
      _
    $region3: #{net_forward.2} parent=1 // pred_check_branch
      %16 = sbr.rel (0) target = $region5
    $region4: #{net_forward.2} parent=1 // pred_region
      _
    $region5: #{net_forward.2} parent=1 // pred_fallthru
      _
    // Predicated region
    $region6: #{net_forward.2} parent=1 // pred_check
      _
    $region7: #{net_forward.2} parent=1 // pred_check_branch
      %18 = sbr.rel (0) target = $region9
    $region8: #{net_forward.2} parent=1 // pred_region
      _
    $region9: #{net_forward.2} parent=1 // pred_fallthru
      _
    // Predicated region
    $region10: #{net_forward.2} parent=1 // pred_check
      _
    $region11: #{net_forward.2} parent=1 // pred_check_branch
      %20 = sbr.rel (0) target = $region13
    $region12: #{net_forward.2} parent=1 // pred_region
      _
    $region13: #{net_forward.2} parent=1 // pred_fallthru
      _
    // Predicated region
    $region14: #{net_forward.2} parent=1 // pred_check
      _
    $region15: #{net_forward.2} parent=1 // pred_check_branch
      %22 = sbr.rel (0) target = $region17
    $region16: #{net_forward.2} parent=1 // pred_region
      %s24 = ssub.s32 6144, 6144
      %25 = vsyncadd [#allocation4], %s24
      %s26 = sshll.u32 [#allocation3], 4
      %s27 = int_to_ptr.vmem [resolvable:$true] %s26
      %32 = dma.hbm_to_vmem [thread:$0]  %s3, 6144, %s27, [#allocation4], 128, 128, 8
    $region17: #{net_forward.2} parent=1 // pred_fallthru
      _
    // Predicated region
    $region18: #{net_forward.2} parent=1 // pred_check
      _
    $region19: #{net_forward.2} parent=1 // pred_check_branch
      %34 = sbr.rel (0) target = $region21
    $region20: #{net_forward.2} parent=1 // pred_region
      _
    $region21: #{net_forward.2} parent=1 // pred_fallthru
      _
    // Predicated region
    $region22: #{net_forward.2} parent=1 // pred_check
      _
    $region23: #{net_forward.2} parent=1 // pred_check_branch
      %36 = sbr.rel (0) target = $region25
    $region24: #{net_forward.2} parent=1 // pred_region
      _
    $region25: #{net_forward.2} parent=1 // pred_fallthru
      _
    // Predicated region
    $region26: #{net_forward.2} parent=1 // pred_check
      _
    $region27: #{net_forward.2} parent=1 // pred_check_branch
      %38 = sbr.rel (0) target = $region29
    $region28: #{net_forward.2} parent=1 // pred_region
      _
    $region29: #{net_forward.2} parent=1 // pred_fallthru
      _
    // Predicated region
    $region30: #{net_forward.2} parent=1 // pred_check
      _
    $region31: #{net_forward.2} parent=1 // pred_check_branch
      %40 = sbr.rel (0) target = $region33
    $region32: #{net_forward.2} parent=1 // pred_region
      %41 = dma.done [#allocation4], 6144
    $region33: #{net_forward.2} parent=1 // pred_fallthru
      _
    %v42 = vld [vmem:[%s0] sm:$0xff]
    %v43 = vld [vmem:[%s1] sm:$0xff]
    %v44 = vld [vmem:[%s1 + $0x8] sm:$0xff]
    %v45 = vld [vmem:[%s1 + $0x10] sm:$0xff]
    %v46 = vld [vmem:[%s1 + $0x18] sm:$0xff]
    %v47 = vld [vmem:[%s1 + $0x20] sm:$0xff]
    %v48 = vld [vmem:[%s1 + $0x28] sm:$0xff]
    %v49 = vld [vmem:[%s2] sm:$0x1]
    %v51 = vlaneseq
    %v52 = vshrl.u32 %v51, 7
    %v53 = vsub.s32 0, %v52
    %v54 = vrot.slane %v49, %v53
    %vm56 = vcmask 392192
    %v58 = vsel %vm56, %v42, 0
    %60 = vmatprep.subr.mxu0 0.0
    %61 = vmatpush1.msra.mxu0 %v43
    %62 = vmatprep.subr.mxu0 0.0
    %63 = vmatpush1.msra.mxu0 %v44
    %64 = vmatprep.subr.mxu0 0.0
    %65 = vmatpush1.msra.mxu0 %v45
    %66 = vmatprep.subr.mxu0 0.0
    %67 = vmatpush1.msra.mxu0 %v46
    %68 = vmatprep.subr.mxu0 0.0
    %69 = vmatpush1.msra.mxu0 %v47
    %70 = vmatprep.subr.mxu0 0.0
    %71 = vmatpush1.msra.mxu0 %v48
    %72 = vmatprep.subr.mxu0 0.0
    %73 = vmatpush1.msra.mxu0 0.0
    %74 = vmatprep.subr.mxu0 0.0
    %75 = vmatpush1.msra.mxu0 0.0
    %76 = vmatprep.subr.mxu0 0.0
    %77 = vmatpush1.msra.mxu0 0.0
    %78 = vmatprep.subr.mxu0 0.0
    %79 = vmatpush1.msra.mxu0 0.0
    %80 = vmatprep.subr.mxu0 0.0
    %81 = vmatpush1.msra.mxu0 0.0
    %82 = vmatprep.subr.mxu0 0.0
    %83 = vmatpush1.msra.mxu0 0.0
    %84 = vmatprep.subr.mxu0 0.0
    %85 = vmatpush1.msra.mxu0 0.0
    %86 = vmatprep.subr.mxu0 0.0
    %87 = vmatpush1.msra.mxu0 0.0
    %88 = vmatprep.subr.mxu0 0.0
    %89 = vmatpush1.msra.mxu0 0.0
    %90 = vmatprep.subr.mxu0 0.0
    %91 = vmatpush1.msra.mxu0 0.0
    %92 = vmatprep.subr.mxu0 0.0
    %93 = vmatpush1.msra.mxu0 0.0
    %94 = vmatprep.subr.mxu0 0.0
    %95 = vmatpush1.msra.mxu0 0.0
    %96 = vmatprep.subr.mxu0 0.0
    %97 = vmatpush1.msra.mxu0 0.0
    %98 = vmatprep.subr.mxu0 0.0
    %99 = vmatpush1.msra.mxu0 0.0
    %100 = vmatprep.subr.mxu0 0.0
    %101 = vmatpush1.msra.mxu0 0.0
    %102 = vmatprep.subr.mxu0 0.0
    %103 = vmatpush1.msra.mxu0 0.0
    %104 = vmatprep.subr.mxu0 0.0
    %105 = vmatpush1.msra.mxu0 0.0
    %106 = vmatprep.subr.mxu0 0.0
    %107 = vmatpush1.msra.mxu0 0.0
    %108 = vmatprep.subr.mxu0 0.0
    %109 = vmatpush1.msra.mxu0 0.0
    %110 = vmatprep.subr.mxu0 0.0
    %111 = vmatpush1.msra.mxu0 0.0
    %112 = vmatprep.subr.mxu0 0.0
    %113 = vmatpush1.msra.mxu0 0.0
    %114 = vmatprep.subr.mxu0 0.0
    %115 = vmatpush1.msra.mxu0 0.0
    %116 = vmatprep.subr.mxu0 0.0
    %117 = vmatpush1.msra.mxu0 0.0
    %118 = vmatprep.subr.mxu0 0.0
    %119 = vmatpush1.msra.mxu0 0.0
    %120 = vmatprep.subr.mxu0 0.0
    %121 = vmatpush1.msra.mxu0 0.0
    %122 = vmatprep.subr.mxu0 0.0
    %123 = vmatpush1.msra.mxu0 0.0
    %124 = vmatprep.mubr.f32.mxu0 0.0
    %125 = vmatmul.mubr.f32.gmra.mrb[0].mxu0 %v58
    %v126 = vpop.f32.mrb[0].mxu0
    %v127 = vadd.f32 %v54, %v126
    %v128 = vpop.f32.mrb[0].mxu0
    %129 = vdwg.mxu0
    %v130 = vmul.f32 %v127, 0.01
    %v131 = vmax.f32 %v127, %v130
    %v132 = vld [vmem:[#allocation3] sm:$0xff]
    %v133 = vld [vmem:[#allocation3 + $0x8] sm:$0xff]
    %v134 = vld [vmem:[#allocation3 + $0x10] sm:$0xff]
    %v135 = vld [vmem:[#allocation3 + $0x18] sm:$0xff]
    %v136 = vld [vmem:[#allocation3 + $0x20] sm:$0xff]
    %v137 = vld [vmem:[#allocation3 + $0x28] sm:$0xff]
    %v138 = vld [vmem:[#allocation3 + $0x30] sm:$0xff]
    %v139 = vld [vmem:[#allocation3 + $0x38] sm:$0xff]
    %v140 = vld [vmem:[#allocation3 + $0x40] sm:$0xff]
    %v141 = vld [vmem:[#allocation3 + $0x48] sm:$0xff]
    %v142 = vld [vmem:[#allocation3 + $0x50] sm:$0xff]
    %v143 = vld [vmem:[#allocation3 + $0x58] sm:$0xff]
    %v144 = vld [vmem:[#allocation3 + $0x60] sm:$0xff]
    %v145 = vld [vmem:[#allocation3 + $0x68] sm:$0xff]
    %v146 = vld [vmem:[#allocation3 + $0x70] sm:$0xff]
    %v147 = vld [vmem:[#allocation3 + $0x78] sm:$0xff]
    %v148 = vld [vmem:[%s4] sm:$0x1]
    %v150 = vlaneseq
    %v151 = vshrl.u32 %v150, 7
    %v152 = vsub.s32 0, %v151
    %v153 = vrot.slane %v148, %v152
    %155 = vmatprep.subr.mxu0 0.0
    %156 = vmatpush1.msra.mxu0 %v132
    %157 = vmatprep.subr.mxu0 0.0
    %158 = vmatpush1.msra.mxu0 %v133
    %159 = vmatprep.subr.mxu0 0.0
    %160 = vmatpush1.msra.mxu0 %v134
    %161 = vmatprep.subr.mxu0 0.0
    %162 = vmatpush1.msra.mxu0 %v135
    %163 = vmatprep.subr.mxu0 0.0
    %164 = vmatpush1.msra.mxu0 %v136
    %165 = vmatprep.subr.mxu0 0.0
    %166 = vmatpush1.msra.mxu0 %v137
    %167 = vmatprep.subr.mxu0 0.0
    %168 = vmatpush1.msra.mxu0 %v138
    %169 = vmatprep.subr.mxu0 0.0
    %170 = vmatpush1.msra.mxu0 %v139
    %171 = vmatprep.subr.mxu0 0.0
    %172 = vmatpush1.msra.mxu0 %v140
    %173 = vmatprep.subr.mxu0 0.0
    %174 = vmatpush1.msra.mxu0 %v141
    %175 = vmatprep.subr.mxu0 0.0
    %176 = vmatpush1.msra.mxu0 %v142
    %177 = vmatprep.subr.mxu0 0.0
    %178 = vmatpush1.msra.mxu0 %v143
    %179 = vmatprep.subr.mxu0 0.0
    %180 = vmatpush1.msra.mxu0 %v144
    %181 = vmatprep.subr.mxu0 0.0
    %182 = vmatpush1.msra.mxu0 %v145
    %183 = vmatprep.subr.mxu0 0.0
    %184 = vmatpush1.msra.mxu0 %v146
    %185 = vmatprep.subr.mxu0 0.0
    %186 = vmatpush1.msra.mxu0 %v147
    %187 = vmatprep.subr.mxu0 0.0
    %188 = vmatpush1.msra.mxu0 0.0
    %189 = vmatprep.subr.mxu0 0.0
    %190 = vmatpush1.msra.mxu0 0.0
    %191 = vmatprep.subr.mxu0 0.0
    %192 = vmatpush1.msra.mxu0 0.0
    %193 = vmatprep.subr.mxu0 0.0
    %194 = vmatpush1.msra.mxu0 0.0
    %195 = vmatprep.subr.mxu0 0.0
    %196 = vmatpush1.msra.mxu0 0.0
    %197 = vmatprep.subr.mxu0 0.0
    %198 = vmatpush1.msra.mxu0 0.0
    %199 = vmatprep.subr.mxu0 0.0
    %200 = vmatpush1.msra.mxu0 0.0
    %201 = vmatprep.subr.mxu0 0.0
    %202 = vmatpush1.msra.mxu0 0.0
    %203 = vmatprep.subr.mxu0 0.0
    %204 = vmatpush1.msra.mxu0 0.0
    %205 = vmatprep.subr.mxu0 0.0
    %206 = vmatpush1.msra.mxu0 0.0
    %207 = vmatprep.subr.mxu0 0.0
    %208 = vmatpush1.msra.mxu0 0.0
    %209 = vmatprep.subr.mxu0 0.0
    %210 = vmatpush1.msra.mxu0 0.0
    %211 = vmatprep.subr.mxu0 0.0
    %212 = vmatpush1.msra.mxu0 0.0
    %213 = vmatprep.subr.mxu0 0.0
    %214 = vmatpush1.msra.mxu0 0.0
    %215 = vmatprep.subr.mxu0 0.0
    %216 = vmatpush1.msra.mxu0 0.0
    %217 = vmatprep.subr.mxu0 0.0
    %218 = vmatpush1.msra.mxu0 0.0
    %219 = vmatprep.mubr.f32.mxu0 0.0
    %220 = vmatmul.mubr.f32.gmra.mrb[0].mxu0 %v131
    %v221 = vpop.f32.mrb[0].mxu0
    %v222 = vadd.f32 %v153, %v221
    %v223 = vpop.f32.mrb[0].mxu0
    %224 = vdwg.mxu0
    %v225 = vmul.f32 %v222, 0.01
    %v226 = vmax.f32 %v222, %v225
    %v227 = vadd.f32 %v131, %v226
    %s228 = scalar_lea.vmem [#allocation3], 128
    %v229 = vld [vmem:[%s228] sm:$0xff]
    %v230 = vld [vmem:[%s228 + $0x8] sm:$0xff]
    %v231 = vld [vmem:[%s228 + $0x10] sm:$0xff]
    %v232 = vld [vmem:[%s228 + $0x18] sm:$0xff]
    %v233 = vld [vmem:[%s228 + $0x20] sm:$0xff]
    %v234 = vld [vmem:[%s228 + $0x28] sm:$0xff]
    %v235 = vld [vmem:[%s228 + $0x30] sm:$0xff]
    %v236 = vld [vmem:[%s228 + $0x38] sm:$0xff]
    %v237 = vld [vmem:[%s228 + $0x40] sm:$0xff]
    %v238 = vld [vmem:[%s228 + $0x48] sm:$0xff]
    %v239 = vld [vmem:[%s228 + $0x50] sm:$0xff]
    %v240 = vld [vmem:[%s228 + $0x58] sm:$0xff]
    %v241 = vld [vmem:[%s228 + $0x60] sm:$0xff]
    %v242 = vld [vmem:[%s228 + $0x68] sm:$0xff]
    %v243 = vld [vmem:[%s228 + $0x70] sm:$0xff]
    %v244 = vld [vmem:[%s228 + $0x78] sm:$0xff]
    %s245 = scalar_lea.vmem %s4, 1
    %v246 = vld [vmem:[%s245] sm:$0x1]
    %v248 = vlaneseq
    %v249 = vshrl.u32 %v248, 7
    %v250 = vsub.s32 0, %v249
    %v251 = vrot.slane %v246, %v250
    %253 = vmatprep.subr.mxu0 0.0
    %254 = vmatpush1.msra.mxu0 %v229
    %255 = vmatprep.subr.mxu0 0.0
    %256 = vmatpush1.msra.mxu0 %v230
    %257 = vmatprep.subr.mxu0 0.0
    %258 = vmatpush1.msra.mxu0 %v231
    %259 = vmatprep.subr.mxu0 0.0
    %260 = vmatpush1.msra.mxu0 %v232
    %261 = vmatprep.subr.mxu0 0.0
    %262 = vmatpush1.msra.mxu0 %v233
    %263 = vmatprep.subr.mxu0 0.0
    %264 = vmatpush1.msra.mxu0 %v234
    %265 = vmatprep.subr.mxu0 0.0
    %266 = vmatpush1.msra.mxu0 %v235
    %267 = vmatprep.subr.mxu0 0.0
    %268 = vmatpush1.msra.mxu0 %v236
    %269 = vmatprep.subr.mxu0 0.0
    %270 = vmatpush1.msra.mxu0 %v237
    %271 = vmatprep.subr.mxu0 0.0
    %272 = vmatpush1.msra.mxu0 %v238
    %273 = vmatprep.subr.mxu0 0.0
    %274 = vmatpush1.msra.mxu0 %v239
    %275 = vmatprep.subr.mxu0 0.0
    %276 = vmatpush1.msra.mxu0 %v240
    %277 = vmatprep.subr.mxu0 0.0
    %278 = vmatpush1.msra.mxu0 %v241
    %279 = vmatprep.subr.mxu0 0.0
    %280 = vmatpush1.msra.mxu0 %v242
    %281 = vmatprep.subr.mxu0 0.0
    %282 = vmatpush1.msra.mxu0 %v243
    %283 = vmatprep.subr.mxu0 0.0
    %284 = vmatpush1.msra.mxu0 %v244
    %285 = vmatprep.subr.mxu0 0.0
    %286 = vmatpush1.msra.mxu0 0.0
    %287 = vmatprep.subr.mxu0 0.0
    %288 = vmatpush1.msra.mxu0 0.0
    %289 = vmatprep.subr.mxu0 0.0
    %290 = vmatpush1.msra.mxu0 0.0
    %291 = vmatprep.subr.mxu0 0.0
    %292 = vmatpush1.msra.mxu0 0.0
    %293 = vmatprep.subr.mxu0 0.0
    %294 = vmatpush1.msra.mxu0 0.0
    %295 = vmatprep.subr.mxu0 0.0
    %296 = vmatpush1.msra.mxu0 0.0
    %297 = vmatprep.subr.mxu0 0.0
    %298 = vmatpush1.msra.mxu0 0.0
    %299 = vmatprep.subr.mxu0 0.0
    %300 = vmatpush1.msra.mxu0 0.0
    %301 = vmatprep.subr.mxu0 0.0
    %302 = vmatpush1.msra.mxu0 0.0
    %303 = vmatprep.subr.mxu0 0.0
    %304 = vmatpush1.msra.mxu0 0.0
    %305 = vmatprep.subr.mxu0 0.0
    %306 = vmatpush1.msra.mxu0 0.0
    %307 = vmatprep.subr.mxu0 0.0
    %308 = vmatpush1.msra.mxu0 0.0
    %309 = vmatprep.subr.mxu0 0.0
    %310 = vmatpush1.msra.mxu0 0.0
    %311 = vmatprep.subr.mxu0 0.0
    %312 = vmatpush1.msra.mxu0 0.0
    %313 = vmatprep.subr.mxu0 0.0
    %314 = vmatpush1.msra.mxu0 0.0
    %315 = vmatprep.subr.mxu0 0.0
    %316 = vmatpush1.msra.mxu0 0.0
    %317 = vmatprep.mubr.f32.mxu0 0.0
    %318 = vmatmul.mubr.f32.gmra.mrb[0].mxu0 %v227
    %v319 = vpop.f32.mrb[0].mxu0
    %v320 = vadd.f32 %v251, %v319
    %v321 = vpop.f32.mrb[0].mxu0
    %322 = vdwg.mxu0
    %v323 = vmul.f32 %v320, 0.01
    %v324 = vmax.f32 %v320, %v323
    %v325 = vadd.f32 %v227, %v324
    %s326 = scalar_lea.vmem [#allocation3], 256
    %v327 = vld [vmem:[%s326] sm:$0xff]
    %v328 = vld [vmem:[%s326 + $0x8] sm:$0xff]
    %v329 = vld [vmem:[%s326 + $0x10] sm:$0xff]
    %v330 = vld [vmem:[%s326 + $0x18] sm:$0xff]
    %v331 = vld [vmem:[%s326 + $0x20] sm:$0xff]
    %v332 = vld [vmem:[%s326 + $0x28] sm:$0xff]
    %v333 = vld [vmem:[%s326 + $0x30] sm:$0xff]
    %v334 = vld [vmem:[%s326 + $0x38] sm:$0xff]
    %v335 = vld [vmem:[%s326 + $0x40] sm:$0xff]
    %v336 = vld [vmem:[%s326 + $0x48] sm:$0xff]
    %v337 = vld [vmem:[%s326 + $0x50] sm:$0xff]
    %v338 = vld [vmem:[%s326 + $0x58] sm:$0xff]
    %v339 = vld [vmem:[%s326 + $0x60] sm:$0xff]
    %v340 = vld [vmem:[%s326 + $0x68] sm:$0xff]
    %v341 = vld [vmem:[%s326 + $0x70] sm:$0xff]
    %v342 = vld [vmem:[%s326 + $0x78] sm:$0xff]
    %s343 = scalar_lea.vmem %s4, 2
    %v344 = vld [vmem:[%s343] sm:$0x1]
    %v346 = vlaneseq
    %v347 = vshrl.u32 %v346, 7
    %v348 = vsub.s32 0, %v347
    %v349 = vrot.slane %v344, %v348
    %351 = vmatprep.subr.mxu0 0.0
    %352 = vmatpush1.msra.mxu0 %v327
    %353 = vmatprep.subr.mxu0 0.0
    %354 = vmatpush1.msra.mxu0 %v328
    %355 = vmatprep.subr.mxu0 0.0
    %356 = vmatpush1.msra.mxu0 %v329
    %357 = vmatprep.subr.mxu0 0.0
    %358 = vmatpush1.msra.mxu0 %v330
    %359 = vmatprep.subr.mxu0 0.0
    %360 = vmatpush1.msra.mxu0 %v331
    %361 = vmatprep.subr.mxu0 0.0
    %362 = vmatpush1.msra.mxu0 %v332
    %363 = vmatprep.subr.mxu0 0.0
    %364 = vmatpush1.msra.mxu0 %v333
    %365 = vmatprep.subr.mxu0 0.0
    %366 = vmatpush1.msra.mxu0 %v334
    %367 = vmatprep.subr.mxu0 0.0
    %368 = vmatpush1.msra.mxu0 %v335
    %369 = vmatprep.subr.mxu0 0.0
    %370 = vmatpush1.msra.mxu0 %v336
    %371 = vmatprep.subr.mxu0 0.0
    %372 = vmatpush1.msra.mxu0 %v337
    %373 = vmatprep.subr.mxu0 0.0
    %374 = vmatpush1.msra.mxu0 %v338
    %375 = vmatprep.subr.mxu0 0.0
    %376 = vmatpush1.msra.mxu0 %v339
    %377 = vmatprep.subr.mxu0 0.0
    %378 = vmatpush1.msra.mxu0 %v340
    %379 = vmatprep.subr.mxu0 0.0
    %380 = vmatpush1.msra.mxu0 %v341
    %381 = vmatprep.subr.mxu0 0.0
    %382 = vmatpush1.msra.mxu0 %v342
    %383 = vmatprep.subr.mxu0 0.0
    %384 = vmatpush1.msra.mxu0 0.0
    %385 = vmatprep.subr.mxu0 0.0
    %386 = vmatpush1.msra.mxu0 0.0
    %387 = vmatprep.subr.mxu0 0.0
    %388 = vmatpush1.msra.mxu0 0.0
    %389 = vmatprep.subr.mxu0 0.0
    %390 = vmatpush1.msra.mxu0 0.0
    %391 = vmatprep.subr.mxu0 0.0
    %392 = vmatpush1.msra.mxu0 0.0
    %393 = vmatprep.subr.mxu0 0.0
    %394 = vmatpush1.msra.mxu0 0.0
    %395 = vmatprep.subr.mxu0 0.0
    %396 = vmatpush1.msra.mxu0 0.0
    %397 = vmatprep.subr.mxu0 0.0
    %398 = vmatpush1.msra.mxu0 0.0
    %399 = vmatprep.subr.mxu0 0.0
    %400 = vmatpush1.msra.mxu0 0.0
    %401 = vmatprep.subr.mxu0 0.0
    %402 = vmatpush1.msra.mxu0 0.0
    %403 = vmatprep.subr.mxu0 0.0
    %404 = vmatpush1.msra.mxu0 0.0
    %405 = vmatprep.subr.mxu0 0.0
    %406 = vmatpush1.msra.mxu0 0.0
    %407 = vmatprep.subr.mxu0 0.0
    %408 = vmatpush1.msra.mxu0 0.0
    %409 = vmatprep.subr.mxu0 0.0
    %410 = vmatpush1.msra.mxu0 0.0
    %411 = vmatprep.subr.mxu0 0.0
    %412 = vmatpush1.msra.mxu0 0.0
    %413 = vmatprep.subr.mxu0 0.0
    %414 = vmatpush1.msra.mxu0 0.0
    %415 = vmatprep.mubr.f32.mxu0 0.0
    %416 = vmatmul.mubr.f32.gmra.mrb[0].mxu0 %v325
    %v417 = vpop.f32.mrb[0].mxu0
    %v418 = vadd.f32 %v349, %v417
    %v419 = vpop.f32.mrb[0].mxu0
    %420 = vdwg.mxu0
    %v421 = vmul.f32 %v418, 0.01
    %v422 = vmax.f32 %v418, %v421
    %v423 = vadd.f32 %v325, %v422
    %v424 = vld [vmem:[%s5] sm:$0xff]
    %v425 = vld [vmem:[#allocation2] sm:$0x1]
    %v427 = vlaneseq
    %v428 = vshrl.u32 %v427, 7
    %v429 = vsub.s32 0, %v428
    %v430 = vrot.slane %v425, %v429
    %431 = vset.pattern.permute.xlu0 0
    %432 = vperm.xlu0 %431, %v430
    %v433 = vpop.permute.xlu0 %432
    %435 = vmatprep.subr.mxu0 0.0
    %436 = vmatpush1.xpose.msra.mxu0 %v423
    %437 = vmatprep.subr.mxu0 0.0
    %438 = vmatpush1.xpose.msra.mxu0 0.0
    %439 = vmatprep.subr.mxu0 0.0
    %440 = vmatpush1.xpose.msra.mxu0 0.0
    %441 = vmatprep.subr.mxu0 0.0
    %442 = vmatpush1.xpose.msra.mxu0 0.0
    %443 = vmatprep.subr.mxu0 0.0
    %444 = vmatpush1.xpose.msra.mxu0 0.0
    %445 = vmatprep.subr.mxu0 0.0
    %446 = vmatpush1.xpose.msra.mxu0 0.0
    %447 = vmatprep.subr.mxu0 0.0
    %448 = vmatpush1.xpose.msra.mxu0 0.0
    %449 = vmatprep.subr.mxu0 0.0
    %450 = vmatpush1.xpose.msra.mxu0 0.0
    %451 = vmatprep.subr.mxu0 0.0
    %452 = vmatpush1.xpose.msra.mxu0 0.0
    %453 = vmatprep.subr.mxu0 0.0
    %454 = vmatpush1.xpose.msra.mxu0 0.0
    %455 = vmatprep.subr.mxu0 0.0
    %456 = vmatpush1.xpose.msra.mxu0 0.0
    %457 = vmatprep.subr.mxu0 0.0
    %458 = vmatpush1.xpose.msra.mxu0 0.0
    %459 = vmatprep.subr.mxu0 0.0
    %460 = vmatpush1.xpose.msra.mxu0 0.0
    %461 = vmatprep.subr.mxu0 0.0
    %462 = vmatpush1.xpose.msra.mxu0 0.0
    %463 = vmatprep.subr.mxu0 0.0
    %464 = vmatpush1.xpose.msra.mxu0 0.0
    %465 = vmatprep.subr.mxu0 0.0
    %466 = vmatpush1.xpose.msra.mxu0 0.0
    %467 = vmatprep.subr.mxu0 0.0
    %468 = vmatpush1.xpose.msra.mxu0 0.0
    %469 = vmatprep.subr.mxu0 0.0
    %470 = vmatpush1.xpose.msra.mxu0 0.0
    %471 = vmatprep.subr.mxu0 0.0
    %472 = vmatpush1.xpose.msra.mxu0 0.0
    %473 = vmatprep.subr.mxu0 0.0
    %474 = vmatpush1.xpose.msra.mxu0 0.0
    %475 = vmatprep.subr.mxu0 0.0
    %476 = vmatpush1.xpose.msra.mxu0 0.0
    %477 = vmatprep.subr.mxu0 0.0
    %478 = vmatpush1.xpose.msra.mxu0 0.0
    %479 = vmatprep.subr.mxu0 0.0
    %480 = vmatpush1.xpose.msra.mxu0 0.0
    %481 = vmatprep.subr.mxu0 0.0
    %482 = vmatpush1.xpose.msra.mxu0 0.0
    %483 = vmatprep.subr.mxu0 0.0
    %484 = vmatpush1.xpose.msra.mxu0 0.0
    %485 = vmatprep.subr.mxu0 0.0
    %486 = vmatpush1.xpose.msra.mxu0 0.0
    %487 = vmatprep.subr.mxu0 0.0
    %488 = vmatpush1.xpose.msra.mxu0 0.0
    %489 = vmatprep.subr.mxu0 0.0
    %490 = vmatpush1.xpose.msra.mxu0 0.0
    %491 = vmatprep.subr.mxu0 0.0
    %492 = vmatpush1.xpose.msra.mxu0 0.0
    %493 = vmatprep.subr.mxu0 0.0
    %494 = vmatpush1.xpose.msra.mxu0 0.0
    %495 = vmatprep.subr.mxu0 0.0
    %496 = vmatpush1.xpose.msra.mxu0 0.0
    %497 = vmatprep.subr.mxu0 0.0
    %498 = vmatpush1.xpose.msra.mxu0 0.0
    %499 = vmatprep.mubr.f32.mxu0 0.0
    %500 = vmatmul.mubr.f32.gmra.mrb[0].mxu0 %v424
    %v501 = vpop.f32.mrb[0].mxu0
    %v502 = vadd.f32 %v433, %v501
    %v503 = vpop.f32.mrb[0].mxu0
    %504 = vdwg.mxu0
    %vm505 = vcmask 64512
    %506 = vst.msk [vmem:[%s7] sm:$0xff] %vm505, %v502
    // Predicated region
    $region34: #{net_forward.2} parent=1 // pred_check
      _
    $region35: #{net_forward.2} parent=1 // pred_check_branch
      %508 = sbr.rel (0) target = $region37
    $region36: #{net_forward.2} parent=1 // pred_region
      _
    $region37: #{net_forward.2} parent=1 // pred_fallthru
      _
    // Predicated region
    $region38: #{net_forward.2} parent=1 // pred_check
      _
    $region39: #{net_forward.2} parent=1 // pred_check_branch
      %510 = sbr.rel (0) target = $region41
    $region40: #{net_forward.2} parent=1 // pred_region
      _
    $region41: #{net_forward.2} parent=1 // pred_fallthru
      _
    %511 = vsyncpa [#allocation4], 1

</llo_original>
